<compile_context>
chip_gen: v7x
topology: tpu7x:2x2x1
jax: 0.10.0
libtpu: 0.0.40
codegen_flags: <defaults>
</compile_context>

<pallas_src>
import functools

import jax
import jax.numpy as jnp
from jax.experimental import pallas as pl
from jax.experimental.pallas import tpu as pltpu

DEFAULT_VALUE = 1000.0  # shear modulus mu


def _kirchhoff_kernel(mu_ref, f_ref, out_ref):
    """tau = mu * (F F^T - I) for one batch tile in component-major layout.

    mu_ref : (1,)    f32 in SMEM
    f_ref  : (9, bb) f32 in VMEM, row c = 3*i + j holds F[:, i, j] (batch on lanes)
    out_ref: (9, bb) f32 in VMEM, row r = 3*i + k holds tau[:, i, k]
    """
    mu = mu_ref[0]
    f = f_ref[...]  # (9, bb), lane-dense

    def comp(i, j):
        c = 3 * i + j
        return f[c:c + 1, :]  # (1, bb) row

    # F F^T is symmetric: compute only the 6 unique rows (i <= k), reuse for (k, i).
    gram = {}
    for i in range(3):
        for k in range(i, 3):
            g = (comp(i, 0) * comp(k, 0)
                 + comp(i, 1) * comp(k, 1)
                 + comp(i, 2) * comp(k, 2))
            if i == k:
                g = g - 1.0  # subtract identity on the diagonal (before mu scaling)
            gram[(i, k)] = g
            gram[(k, i)] = g

    # Assemble the full 9-row result, one hoisted full-tile multiply by mu,
    # and ONE dense full-tile store.
    tile = jnp.concatenate(
        [gram[(i, k)] for i in range(3) for k in range(3)], axis=0)  # (9, bb)
    out_ref[...] = mu * tile


@functools.partial(jax.jit, static_argnames=("block_b",))
def kirchhoff_stress(F, mu, *, block_b=8192):
    """F: (B, 3, 3) f32, mu: scalar -> Kirchhoff stress (B, 3, 3) f32."""
    B = F.shape[0]

    # Component-major, lane-dense layout: (9, B), batch on lanes.
    # TODO(synk): ideally the upstream producer stores F SoA as (9, B) /
    # (3, 3, B) so this wrapper transpose (an extra HBM pass) disappears.
    f_t = F.astype(jnp.float32).reshape(B, 9).T          # (9, B)
    mu_arr = jnp.asarray(mu, jnp.float32).reshape(1)

    # Lane tile must be a multiple of 128; don't exceed (padded) B.
    padded_b = ((B + 127) // 128) * 128
    bb = max(128, min(block_b, padded_b))
    # Keep >= 2 grid steps for large B so both v7x TensorCores get work.
    if B > 256 and -(-B // bb) < 2:
        bb = max(128, ((-(-B // 2) + 127) // 128) * 128)

    grid = (pl.cdiv(B, bb),)
    out_t = pl.pallas_call(
        _kirchhoff_kernel,
        out_shape=jax.ShapeDtypeStruct((9, B), jnp.float32),
        grid=grid,
        in_specs=[
            pl.BlockSpec(memory_space=pltpu.MemorySpace.SMEM),   # mu (scalar)
            pl.BlockSpec((9, bb), lambda i: (0, i)),             # F tile (9, bb)
        ],
        out_specs=pl.BlockSpec((9, bb), lambda i: (0, i)),
        compiler_params=pltpu.CompilerParams(
            dimension_semantics=("parallel",),
        ),
        cost_estimate=pl.CostEstimate(
            flops=45 * B, transcendentals=0, bytes_accessed=72 * B),
    )(mu_arr, f_t)

    return out_t.T.reshape(B, 3, 3)


class Physics:
    """JAX/Pallas port of the PyTorch `Physics` module (neo-Hookean, 1 param)."""

    def __init__(self, param: float = DEFAULT_VALUE):
        # Deterministic parameter init (matches nn.Parameter(torch.tensor(param))).
        self.param = jnp.asarray(param, jnp.float32)

    def forward(self, F):
        return kirchhoff_stress(F, self.param)

    __call__ = forward


if __name__ == "__main__":
    key = jax.random.PRNGKey(0)
    B = 16  # small batch for the demo

    # Deformation gradients: identity + small random perturbation.
    eye = jnp.eye(3, dtype=jnp.float32)[None]
    pert = 0.1 * jax.random.normal(key, (B, 3, 3), dtype=jnp.float32)
    F = eye + pert

    physics = Physics(DEFAULT_VALUE)
    tau = jax.block_until_ready(physics(F))

    # Reference check against plain-JAX computation.
    ref = physics.param * (jnp.einsum("bij,bkj->bik", F, F) - eye)
    assert tau.shape == (B, 3, 3)
    assert jnp.allclose(tau, ref, atol=1e-3, rtol=1e-5), "mismatch vs reference"

    print("KERNEL_OK")
</pallas_src>

<mosaic_0001>
module attributes {stable_mosaic.version = 11 : i64} {
  func.func @_kirchhoff_kernel(%arg0: i32, %arg1: memref<1xf32, #tpu.memory_space<smem>>, %arg2: memref<9x128xf32, #tpu.memory_space<vmem>>, %arg3: memref<9x128xf32, #tpu.memory_space<vmem>>) attributes {dimension_semantics = [#tpu.dimension_semantics<parallel>], iteration_bounds = array<i64: 1>, scalar_prefetch = 0 : i64, scratch_operands = 0 : i64, tpu.core_type = #tpu.core_type<tc>, window_params = [{transform_indices = @transform_0, window_bounds = array<i64: 1>}, {transform_indices = @transform_1, window_bounds = array<i64: 9, 128>}, {transform_indices = @transform_2, window_bounds = array<i64: 9, 128>}]} {
    %c0 = arith.constant 0 : index
    %0 = memref.load %arg1[%c0] : memref<1xf32, #tpu.memory_space<smem>>
    %c0_0 = arith.constant 0 : index
    %c0_1 = arith.constant 0 : index
    %1 = vector.load %arg2[%c0_0, %c0_1] : memref<9x128xf32, #tpu.memory_space<vmem>>, vector<9x128xf32>
    %2 = vector.extract_strided_slice %1 {offsets = [0, 0], sizes = [1, 128], strides = [1, 1]} : vector<9x128xf32> to vector<1x128xf32>
    %3 = vector.extract_strided_slice %1 {offsets = [0, 0], sizes = [1, 128], strides = [1, 1]} : vector<9x128xf32> to vector<1x128xf32>
    %4 = arith.mulf %2, %3 : vector<1x128xf32>
    %5 = vector.extract_strided_slice %1 {offsets = [1, 0], sizes = [1, 128], strides = [1, 1]} : vector<9x128xf32> to vector<1x128xf32>
    %6 = vector.extract_strided_slice %1 {offsets = [1, 0], sizes = [1, 128], strides = [1, 1]} : vector<9x128xf32> to vector<1x128xf32>
    %7 = arith.mulf %5, %6 : vector<1x128xf32>
    %8 = arith.addf %4, %7 : vector<1x128xf32>
    %9 = vector.extract_strided_slice %1 {offsets = [2, 0], sizes = [1, 128], strides = [1, 1]} : vector<9x128xf32> to vector<1x128xf32>
    %10 = vector.extract_strided_slice %1 {offsets = [2, 0], sizes = [1, 128], strides = [1, 1]} : vector<9x128xf32> to vector<1x128xf32>
    %11 = arith.mulf %9, %10 : vector<1x128xf32>
    %12 = arith.addf %8, %11 : vector<1x128xf32>
    %cst = arith.constant 1.000000e+00 : f32
    %13 = vector.broadcast %cst : f32 to vector<1x128xf32>
    %14 = arith.subf %12, %13 : vector<1x128xf32>
    %15 = vector.extract_strided_slice %1 {offsets = [0, 0], sizes = [1, 128], strides = [1, 1]} : vector<9x128xf32> to vector<1x128xf32>
    %16 = vector.extract_strided_slice %1 {offsets = [3, 0], sizes = [1, 128], strides = [1, 1]} : vector<9x128xf32> to vector<1x128xf32>
    %17 = arith.mulf %15, %16 : vector<1x128xf32>
    %18 = vector.extract_strided_slice %1 {offsets = [1, 0], sizes = [1, 128], strides = [1, 1]} : vector<9x128xf32> to vector<1x128xf32>
    %19 = vector.extract_strided_slice %1 {offsets = [4, 0], sizes = [1, 128], strides = [1, 1]} : vector<9x128xf32> to vector<1x128xf32>
    %20 = arith.mulf %18, %19 : vector<1x128xf32>
    %21 = arith.addf %17, %20 : vector<1x128xf32>
    %22 = vector.extract_strided_slice %1 {offsets = [2, 0], sizes = [1, 128], strides = [1, 1]} : vector<9x128xf32> to vector<1x128xf32>
    %23 = vector.extract_strided_slice %1 {offsets = [5, 0], sizes = [1, 128], strides = [1, 1]} : vector<9x128xf32> to vector<1x128xf32>
    %24 = arith.mulf %22, %23 : vector<1x128xf32>
    %25 = arith.addf %21, %24 : vector<1x128xf32>
    %26 = vector.extract_strided_slice %1 {offsets = [0, 0], sizes = [1, 128], strides = [1, 1]} : vector<9x128xf32> to vector<1x128xf32>
    %27 = vector.extract_strided_slice %1 {offsets = [6, 0], sizes = [1, 128], strides = [1, 1]} : vector<9x128xf32> to vector<1x128xf32>
    %28 = arith.mulf %26, %27 : vector<1x128xf32>
    %29 = vector.extract_strided_slice %1 {offsets = [1, 0], sizes = [1, 128], strides = [1, 1]} : vector<9x128xf32> to vector<1x128xf32>
    %30 = vector.extract_strided_slice %1 {offsets = [7, 0], sizes = [1, 128], strides = [1, 1]} : vector<9x128xf32> to vector<1x128xf32>
    %31 = arith.mulf %29, %30 : vector<1x128xf32>
    %32 = arith.addf %28, %31 : vector<1x128xf32>
    %33 = vector.extract_strided_slice %1 {offsets = [2, 0], sizes = [1, 128], strides = [1, 1]} : vector<9x128xf32> to vector<1x128xf32>
    %34 = vector.extract_strided_slice %1 {offsets = [8, 0], sizes = [1, 128], strides = [1, 1]} : vector<9x128xf32> to vector<1x128xf32>
    %35 = arith.mulf %33, %34 : vector<1x128xf32>
    %36 = arith.addf %32, %35 : vector<1x128xf32>
    %37 = vector.extract_strided_slice %1 {offsets = [3, 0], sizes = [1, 128], strides = [1, 1]} : vector<9x128xf32> to vector<1x128xf32>
    %38 = vector.extract_strided_slice %1 {offsets = [3, 0], sizes = [1, 128], strides = [1, 1]} : vector<9x128xf32> to vector<1x128xf32>
    %39 = arith.mulf %37, %38 : vector<1x128xf32>
    %40 = vector.extract_strided_slice %1 {offsets = [4, 0], sizes = [1, 128], strides = [1, 1]} : vector<9x128xf32> to vector<1x128xf32>
    %41 = vector.extract_strided_slice %1 {offsets = [4, 0], sizes = [1, 128], strides = [1, 1]} : vector<9x128xf32> to vector<1x128xf32>
    %42 = arith.mulf %40, %41 : vector<1x128xf32>
    %43 = arith.addf %39, %42 : vector<1x128xf32>
    %44 = vector.extract_strided_slice %1 {offsets = [5, 0], sizes = [1, 128], strides = [1, 1]} : vector<9x128xf32> to vector<1x128xf32>
    %45 = vector.extract_strided_slice %1 {offsets = [5, 0], sizes = [1, 128], strides = [1, 1]} : vector<9x128xf32> to vector<1x128xf32>
    %46 = arith.mulf %44, %45 : vector<1x128xf32>
    %47 = arith.addf %43, %46 : vector<1x128xf32>
    %cst_2 = arith.constant 1.000000e+00 : f32
    %48 = vector.broadcast %cst_2 : f32 to vector<1x128xf32>
    %49 = arith.subf %47, %48 : vector<1x128xf32>
    %50 = vector.extract_strided_slice %1 {offsets = [3, 0], sizes = [1, 128], strides = [1, 1]} : vector<9x128xf32> to vector<1x128xf32>
    %51 = vector.extract_strided_slice %1 {offsets = [6, 0], sizes = [1, 128], strides = [1, 1]} : vector<9x128xf32> to vector<1x128xf32>
    %52 = arith.mulf %50, %51 : vector<1x128xf32>
    %53 = vector.extract_strided_slice %1 {offsets = [4, 0], sizes = [1, 128], strides = [1, 1]} : vector<9x128xf32> to vector<1x128xf32>
    %54 = vector.extract_strided_slice %1 {offsets = [7, 0], sizes = [1, 128], strides = [1, 1]} : vector<9x128xf32> to vector<1x128xf32>
    %55 = arith.mulf %53, %54 : vector<1x128xf32>
    %56 = arith.addf %52, %55 : vector<1x128xf32>
    %57 = vector.extract_strided_slice %1 {offsets = [5, 0], sizes = [1, 128], strides = [1, 1]} : vector<9x128xf32> to vector<1x128xf32>
    %58 = vector.extract_strided_slice %1 {offsets = [8, 0], sizes = [1, 128], strides = [1, 1]} : vector<9x128xf32> to vector<1x128xf32>
    %59 = arith.mulf %57, %58 : vector<1x128xf32>
    %60 = arith.addf %56, %59 : vector<1x128xf32>
    %61 = vector.extract_strided_slice %1 {offsets = [6, 0], sizes = [1, 128], strides = [1, 1]} : vector<9x128xf32> to vector<1x128xf32>
    %62 = vector.extract_strided_slice %1 {offsets = [6, 0], sizes = [1, 128], strides = [1, 1]} : vector<9x128xf32> to vector<1x128xf32>
    %63 = arith.mulf %61, %62 : vector<1x128xf32>
    %64 = vector.extract_strided_slice %1 {offsets = [7, 0], sizes = [1, 128], strides = [1, 1]} : vector<9x128xf32> to vector<1x128xf32>
    %65 = vector.extract_strided_slice %1 {offsets = [7, 0], sizes = [1, 128], strides = [1, 1]} : vector<9x128xf32> to vector<1x128xf32>
    %66 = arith.mulf %64, %65 : vector<1x128xf32>
    %67 = arith.addf %63, %66 : vector<1x128xf32>
    %68 = vector.extract_strided_slice %1 {offsets = [8, 0], sizes = [1, 128], strides = [1, 1]} : vector<9x128xf32> to vector<1x128xf32>
    %69 = vector.extract_strided_slice %1 {offsets = [8, 0], sizes = [1, 128], strides = [1, 1]} : vector<9x128xf32> to vector<1x128xf32>
    %70 = arith.mulf %68, %69 : vector<1x128xf32>
    %71 = arith.addf %67, %70 : vector<1x128xf32>
    %cst_3 = arith.constant 1.000000e+00 : f32
    %72 = vector.broadcast %cst_3 : f32 to vector<1x128xf32>
    %73 = arith.subf %71, %72 : vector<1x128xf32>
    %74 = tpu.concatenate %14, %25, %36, %25, %49, %60, %36, %60, %73 in 0 : vector<1x128xf32>, vector<1x128xf32>, vector<1x128xf32>, vector<1x128xf32>, vector<1x128xf32>, vector<1x128xf32>, vector<1x128xf32>, vector<1x128xf32>, vector<1x128xf32> -> vector<9x128xf32>
    %75 = vector.broadcast %0 : f32 to vector<9x128xf32>
    %76 = arith.mulf %75, %74 : vector<9x128xf32>
    %c0_4 = arith.constant 0 : index
    %c0_5 = arith.constant 0 : index
    %77 = vector.load %arg3[%c0_4, %c0_5] : memref<9x128xf32, #tpu.memory_space<vmem>>, vector<9x128xf32>
    tpu.vector_store %arg3[%c0_4, %c0_5], %76 {strides = array<i32>} : memref<9x128xf32, #tpu.memory_space<vmem>>, vector<9x128xf32>,
    return
  }
  func.func @transform_0(%arg0: i32) -> i32 {
    %c0_i32 = arith.constant 0 : i32
    %c0_i32_0 = arith.constant 0 : i32
    return %c0_i32 : i32
  }
  func.func @transform_1(%arg0: i32) -> (i32, i32) {
    %c0_i32 = arith.constant 0 : i32
    %c0_i32_0 = arith.constant 0 : i32
    return %c0_i32, %arg0 : i32, i32
  }
  func.func @transform_2(%arg0: i32) -> (i32, i32) {
    %c0_i32 = arith.constant 0 : i32
    %c0_i32_0 = arith.constant 0 : i32
    return %c0_i32, %arg0 : i32, i32
  }
}

</mosaic_0001>

<llo_original>
// kernel: kirchhoff_stress.1
$region0: #{kirchhoff_stress.1}
  #allocation0 [shape = 'u32[]', space=smem, size = 0x4, offset = 0x4, fixed_abs, tag = 'smem constant byte address 0x4 - core index']
  #allocation1 [shape = 'u32[144,128]{1,0:T(1,128)}', space=vmem, size = 0x12000, scoped, tag = 'internal scratch']
  #allocation2 [shape = 'f32[1]{0:T(128)S(6)}', space=smem, size = 0x200, scoped, tag = 'scoped memory for kirchhoff_stress.1']
  %s0 = inlined_call_operand.<no memory space> [shape: f32[1], index: 0, kind: input, shape index: {}]
  %s1 = inlined_call_operand.vmem [shape: f32[9,16], index: 1, kind: input, shape index: {}]
  %s2 = inlined_call_operand.vmem [shape: f32[9,16], index: 2, kind: output, shape index: {}]
  %s3 = sld [smem:[#allocation0]]
  $region18: #{kirchhoff_stress.1} parent=0
    _
  %s5 = ssub.s32 1, %s3
  %s6 = scalar_select 0, %s5, %s3
  %7 = sst [smem:[#allocation2]] %s0
  // Predicated region
  $region2: #{kirchhoff_stress.1} parent=0 // pred_check
    _
  $region3: #{kirchhoff_stress.1} parent=0 // pred_check_branch
    %9 = sbr.rel (0) target = $region5
  $region4: #{kirchhoff_stress.1} parent=0 // pred_region
    _
  $region5: #{kirchhoff_stress.1} parent=0 // pred_fallthru
    _
  // Predicated region
  $region6: #{kirchhoff_stress.1} parent=0 // pred_check
    _
  $region7: #{kirchhoff_stress.1} parent=0 // pred_check_branch
    %11 = sbr.rel (0) target = $region9
  $region8: #{kirchhoff_stress.1} parent=0 // pred_region
    _
  $region9: #{kirchhoff_stress.1} parent=0 // pred_fallthru
    _
  %s12 = sld [smem:[#allocation2]]
  %v13 = vld [vmem:[%s1] sm:$0xff]
  %v14 = vld [vmem:[%s1 + $0x8] sm:$0x1]
  %v15 = vmul.f32 %v13, %v13
  %v17 = vrot.slane %v15, 1
  %v19 = vadd.f32 %v15, %v17
  %v20 = vrot.slane %v15, 2
  %v22 = vadd.f32 %v19, %v20
  %v23 = vsub.f32 %v22, 1.0
  %v25 = vrot.slane %v13, 3
  %v27 = vmul.f32 %v13, %v25
  %v29 = vrot.slane %v27, 1
  %v31 = vadd.f32 %v27, %v29
  %v32 = vrot.slane %v27, 2
  %v34 = vadd.f32 %v31, %v32
  %v35 = vrot.slane %v13, 6
  %v37 = vmul.f32 %v13, %v35
  %v39 = vrot.slane %v37, 1
  %v41 = vadd.f32 %v37, %v39
  %v43 = vrot.slane %v14, 6
  %v45 = vmul.f32 %v13, %v43
  %v47 = vrot.slane %v45, 2
  %v49 = vadd.f32 %v41, %v47
  %v50 = vrot.slane %v14, 3
  %v52 = vmul.f32 %v13, %v50
  %v54 = vrot.slane %v52, 2
  %v56 = vadd.f32 %v31, %v54
  %v57 = vmul.f32 %v14, %v14
  %v59 = vrot.slane %v57, 2
  %v61 = vadd.f32 %v19, %v59
  %v62 = vsub.f32 %v61, 1.0
  %v64 = vrot.slane %v34, 7
  %v67 = vrot.slane %v49, 6
  %v69 = vrot.slane %v34, 5
  %v72 = vrot.slane %v23, 7
  %v75 = vrot.slane %v56, 6
  %v77 = vrot.slane %v49, 2
  %v79 = vrot.slane %v56, 4
  %v82 = vrot.slane %v62, 6
  %vm84 = vcmask 1040384
  %v85 = vsel %vm84, %v23, %v64
  %vm86 = vcmask 1041408
  %v87 = vsel %vm86, %v85, %v67
  %vm88 = vcmask 1042432
  %v89 = vsel %vm88, %v87, %v69
  %vm90 = vcmask 1043456
  %v91 = vsel %vm90, %v89, %v72
  %vm92 = vcmask 1044480
  %v93 = vsel %vm92, %v91, %v75
  %vm94 = vcmask 1045504
  %v95 = vsel %vm94, %v93, %v77
  %vm96 = vcmask 1046528
  %v97 = vsel %vm96, %v95, %v79
  %v98 = vstv %s12
  %v99 = vmul.f32 %v98, %v97
  %v100 = vmul.f32 %v98, %v82
  %101 = vst [vmem:[%s2] sm:$0xff] %v99
  %102 = vst [vmem:[%s2 + $0x8] sm:$0x1] %v100
  // Predicated region
  $region10: #{kirchhoff_stress.1} parent=0 // pred_check
    _
  $region11: #{kirchhoff_stress.1} parent=0 // pred_check_branch
    %104 = sbr.rel (0) target = $region13
  $region12: #{kirchhoff_stress.1} parent=0 // pred_region
    _
  $region13: #{kirchhoff_stress.1} parent=0 // pred_fallthru
    _
  // Predicated region
  $region14: #{kirchhoff_stress.1} parent=0 // pred_check
    _
  $region15: #{kirchhoff_stress.1} parent=0 // pred_check_branch
    %106 = sbr.rel (0) target = $region17
  $region16: #{kirchhoff_stress.1} parent=0 // pred_region
    _
  $region17: #{kirchhoff_stress.1} parent=0 // pred_fallthru
    _

</llo_original>
